<compile_context>
chip_gen: v6e
topology: v6e:2x2x1
jax: 0.10.0
libtpu: 0.0.40
codegen_flags: <defaults>
</compile_context>

<pallas_src>
import functools

import jax
import jax.numpy as jnp
from jax import lax
from jax.experimental import pallas as pl
from jax.experimental.pallas import tpu as pltpu

STATS_W = 128        # lane-aligned width of the per-class statistics slab
TN_MAX = 8192        # maximum lane tile (elements)


def _round_up(x, m):
    return (x + m - 1) // m * m


def _stats_kernel(*refs, n_heads, tn, m_valid, mask_needed):
    """Accumulate per-head, per-class [inter, sigmoid_sum, target_sum, bce_sum]."""
    pred_refs = refs[:n_heads]
    t_ref = refs[n_heads]
    out_ref = refs[n_heads + 1]          # (n_heads, C, STATS_W), resident accumulator

    b = pl.program_id(1)
    j = pl.program_id(2)

    @pl.when((b == 0) & (j == 0))
    def _():
        out_ref[...] = jnp.zeros_like(out_ref)

    t = t_ref[...].astype(jnp.float32)                       # (C, tn) targets
    if mask_needed:
        col = j * tn + lax.broadcasted_iota(jnp.int32, t.shape, 1)
        valid = col < m_valid
        t = jnp.where(valid, t, 0.0)

    tsum = t.sum(axis=-1, keepdims=True)                     # (C, 1)

    for h in range(n_heads):
        p = pred_refs[h][...].astype(jnp.float32)            # (C, tn) logits
        if mask_needed:
            # -1e4 drives sigmoid and log1p(exp(-|x|)) to exactly 0 in f32,
            # so padded lanes contribute exactly zero to every statistic.
            p = jnp.where(valid, p, -1e4)

        # Shared transcendental path: one exp + one log per element.
        e = jnp.exp(-jnp.abs(p))
        r = pl.reciprocal(1.0 + e)        # exact; approx=True is a v7x knob
        sig = jnp.where(p >= 0.0, r, e * r)                  # sigmoid(p)
        bce = jnp.maximum(p, 0.0) - p * t + jnp.log1p(e)     # stable BCE-with-logits

        inter = (sig * t).sum(axis=-1, keepdims=True)        # (C, 1)
        psum = sig.sum(axis=-1, keepdims=True)               # (C, 1)
        bsum = bce.sum(axis=-1, keepdims=True)               # (C, 1)

        # Single packed lane-contiguous update per head (no four width-1 stores).
        upd = jnp.concatenate([inter, psum, tsum, bsum], axis=-1)   # (C, 4)
        out_ref[h, :, 0:4] += upd


def _loss_stats(preds, target, *, tn_max=TN_MAX):
    """Fused reduction over all heads; returns (n_heads, C, STATS_W) stats slab."""
    n = len(preds)
    B, C, H, W = preds[0].shape
    M = H * W

    # Free reshapes of contiguous NCHW -> (B, C, H*W): no transpose, no pad,
    # no host-side dtype cast.
    p3 = [p.reshape(B, C, M) for p in preds]
    t3 = target.reshape(B, C, M)

    # Large lane tile, capped so (n_heads + 1) inputs x 2 pipeline buffers stay
    # comfortably inside VMEM on every TPU generation.
    bytes_per_lane = 4 * C * (n + 1) * 2
    tn_cap = max(128, ((8 * 1024 * 1024) // bytes_per_lane) // 128 * 128)
    tn = min(tn_max, tn_cap, _round_up(M, 128))
    num_tiles = pl.cdiv(M, tn)
    mask_needed = (num_tiles * tn != M)

    # Leading "parallel" axis splits the batch so 2-TensorCore chips (v7x) use
    # both cores; on 1-TC chips it just runs sequentially.
    nsplit = 2 if (B >= 2 and B % 2 == 0) else 1
    b_per = B // nsplit

    data_spec = pl.BlockSpec((None, C, tn), lambda s, b, j: (s * b_per + b, 0, j))
    out_spec = pl.BlockSpec((None, n, C, STATS_W), lambda s, b, j: (s, 0, 0, 0))

    kernel = functools.partial(
        _stats_kernel, n_heads=n, tn=tn, m_valid=M, mask_needed=mask_needed)

    stats = pl.pallas_call(
        kernel,
        out_shape=jax.ShapeDtypeStruct((nsplit, n, C, STATS_W), jnp.float32),
        grid=(nsplit, b_per, num_tiles),
        in_specs=[data_spec] * n + [data_spec],
        out_specs=out_spec,
        compiler_params=pltpu.CompilerParams(
            dimension_semantics=("parallel", "arbitrary", "arbitrary")),
    )(*p3, t3)

    return stats.sum(axis=0)             # (n_heads, C, STATS_W)


def _combine(head_stats, n_elements, smoothing):
    """Turn one head's (C, STATS_W) stats into dice_loss + bce_loss."""
    inter = head_stats[:, 0]
    psum = head_stats[:, 1]
    tsum = head_stats[:, 2]
    bsum = head_stats[:, 3]
    dice = (2.0 * inter + smoothing) / (psum + tsum + smoothing)   # (C,)
    dice_loss = jnp.mean(1.0 - dice)
    bce_loss = jnp.sum(bsum) / n_elements                          # mean reduction
    return dice_loss + bce_loss


def bce_with_dice_loss(pred, target, *, num_classes, yita=None, smoothing=1.0):
    """JAX/Pallas equivalent of BCEWithDiceLoss_.forward."""
    is_list = isinstance(pred, (list, tuple))
    preds = list(pred) if is_list else [pred]

    B, C, H, W = preds[0].shape
    if num_classes != C:
        raise ValueError(f"num_classes={num_classes} does not match channel dim {C}")

    # All heads share the target (and hence its shape), so one fused kernel call
    # streams the target from HBM exactly once for every head.
    stats = _loss_stats(preds, target)                 # (n_heads, C, STATS_W)
    n_elements = float(B * C * H * W)
    losses = [_combine(stats[i], n_elements, smoothing) for i in range(len(preds))]

    if not is_list:
        return losses[0]

    weights = yita if yita is not None else [1.0] * len(preds)
    total = jnp.float32(0.0)
    for w, loss in zip(weights, losses):
        total = total + w * loss
    return total


if __name__ == "__main__":
    B, C, H, W = 2, 4, 16, 16
    key = jax.random.PRNGKey(0)
    k1, k2, k3 = jax.random.split(key, 3)

    pred = jax.random.normal(k1, (B, C, H, W), dtype=jnp.float32)
    target = (jax.random.uniform(k2, (B, C, H, W)) > 0.5).astype(jnp.float32)

    # single-head case
    loss_single = bce_with_dice_loss(pred, target, num_classes=C, smoothing=1.0)
    loss_single = jax.block_until_ready(loss_single)

    # deep-supervision (list) case with per-head weights yita
    pred2 = jax.random.normal(k3, (B, C, H, W), dtype=jnp.float32)
    loss_list = bce_with_dice_loss(
        [pred, pred2], target, num_classes=C, yita=[0.5, 1.0], smoothing=1.0)
    loss_list = jax.block_until_ready(loss_list)

    assert jnp.isfinite(loss_single) and jnp.isfinite(loss_list)
    print("KERNEL_OK")
</pallas_src>

<mosaic_0001>
module attributes {stable_mosaic.version = 11 : i64} {
  func.func @_stats_kernel(%arg0: i32, %arg1: i32, %arg2: i32, %arg3: memref<1x4x256xf32, #tpu.memory_space<vmem>>, %arg4: memref<1x4x256xf32, #tpu.memory_space<vmem>>, %arg5: memref<1x1x4x128xf32, #tpu.memory_space<vmem>>) attributes {dimension_semantics = [#tpu.dimension_semantics<parallel>, #tpu.dimension_semantics<arbitrary>, #tpu.dimension_semantics<arbitrary>], iteration_bounds = array<i64: 2, 1, 1>, scalar_prefetch = 0 : i64, scratch_operands = 0 : i64, tpu.core_type = #tpu.core_type<tc>, window_params = [{transform_indices = @transform_0, window_bounds = array<i64: 1, 4, 256>}, {transform_indices = @transform_1, window_bounds = array<i64: 1, 4, 256>}, {transform_indices = @transform_2, window_bounds = array<i64: 1, 1, 4, 128>}]} {
    %c0_i32 = arith.constant 0 : i32
    %0 = arith.cmpi eq, %arg1, %c0_i32 : i32
    %c0_i32_0 = arith.constant 0 : i32
    %1 = arith.cmpi eq, %arg2, %c0_i32_0 : i32
    %2 = arith.andi %0, %1 : i1
    %3 = arith.extui %2 : i1 to i32
    %c0_i32_1 = arith.constant 0 : i32
    %4 = arith.cmpi ne, %3, %c0_i32_1 : i32
    scf.if %4 {
      %cst_22 = arith.constant 0.000000e+00 : f32
      %42 = vector.broadcast %cst_22 : f32 to vector<1x4x128xf32>
      %c0_23 = arith.constant 0 : index
      %c0_24 = arith.constant 0 : index
      %c0_25 = arith.constant 0 : index
      %c0_26 = arith.constant 0 : index
      %43 = vector.load %arg5[%c0_23, %c0_24, %c0_25, %c0_26] : memref<1x1x4x128xf32, #tpu.memory_space<vmem>>, vector<1x1x4x128xf32>
      %44 = vector.shape_cast %43 : vector<1x1x4x128xf32> to vector<1x4x128xf32>
      %45 = vector.shape_cast %42 : vector<1x4x128xf32> to vector<1x1x4x128xf32>
      tpu.vector_store %arg5[%c0_23, %c0_24, %c0_25, %c0_26], %45 {strides = array<i32>} : memref<1x1x4x128xf32, #tpu.memory_space<vmem>>, vector<1x1x4x128xf32>,
    } else {
    }
    %c0 = arith.constant 0 : index
    %c0_2 = arith.constant 0 : index
    %c0_3 = arith.constant 0 : index
    %5 = vector.load %arg4[%c0, %c0_2, %c0_3] : memref<1x4x256xf32, #tpu.memory_space<vmem>>, vector<1x4x256xf32>
    %6 = vector.shape_cast %5 : vector<1x4x256xf32> to vector<4x256xf32>
    %cst = arith.constant dense<0.000000e+00> : vector<4xf32>
    %7 = vector.multi_reduction <add>, %6, %cst [1] : vector<4x256xf32> to vector<4xf32>
    %8 = vector.shape_cast %7 : vector<4xf32> to vector<4x1xf32>
    %c0_4 = arith.constant 0 : index
    %c0_5 = arith.constant 0 : index
    %c0_6 = arith.constant 0 : index
    %9 = vector.load %arg3[%c0_4, %c0_5, %c0_6] : memref<1x4x256xf32, #tpu.memory_space<vmem>>, vector<1x4x256xf32>
    %10 = vector.shape_cast %9 : vector<1x4x256xf32> to vector<4x256xf32>
    %11 = math.absf %10 : vector<4x256xf32>
    %cst_7 = arith.constant 0.000000e+00 : f32
    %12 = vector.broadcast %cst_7 : f32 to vector<4x256xf32>
    %13 = arith.subf %12, %11 : vector<4x256xf32>
    %14 = math.exp %13 : vector<4x256xf32>
    %cst_8 = arith.constant 1.000000e+00 : f32
    %15 = vector.broadcast %cst_8 : f32 to vector<4x256xf32>
    %16 = arith.addf %15, %14 : vector<4x256xf32>
    %17 = tpu.reciprocal %16 : vector<4x256xf32> -> vector<4x256xf32>
    %cst_9 = arith.constant 0.000000e+00 : f32
    %18 = vector.broadcast %cst_9 : f32 to vector<4x256xf32>
    %19 = arith.cmpf oge, %10, %18 : vector<4x256xf32>
    %20 = arith.mulf %14, %17 : vector<4x256xf32>
    %21 = arith.select %19, %17, %20 : vector<4x256xi1>, vector<4x256xf32>
    %cst_10 = arith.constant 0.000000e+00 : f32
    %22 = vector.broadcast %cst_10 : f32 to vector<4x256xf32>
    %23 = arith.maximumf %10, %22 : vector<4x256xf32>
    %24 = arith.mulf %10, %6 : vector<4x256xf32>
    %25 = arith.subf %23, %24 : vector<4x256xf32>
    %26 = math.log1p %14 : vector<4x256xf32>
    %27 = arith.addf %25, %26 : vector<4x256xf32>
    %28 = arith.mulf %21, %6 : vector<4x256xf32>
    %cst_11 = arith.constant dense<0.000000e+00> : vector<4xf32>
    %29 = vector.multi_reduction <add>, %28, %cst_11 [1] : vector<4x256xf32> to vector<4xf32>
    %30 = vector.shape_cast %29 : vector<4xf32> to vector<4x1xf32>
    %cst_12 = arith.constant dense<0.000000e+00> : vector<4xf32>
    %31 = vector.multi_reduction <add>, %21, %cst_12 [1] : vector<4x256xf32> to vector<4xf32>
    %32 = vector.shape_cast %31 : vector<4xf32> to vector<4x1xf32>
    %cst_13 = arith.constant dense<0.000000e+00> : vector<4xf32>
    %33 = vector.multi_reduction <add>, %27, %cst_13 [1] : vector<4x256xf32> to vector<4xf32>
    %34 = vector.shape_cast %33 : vector<4xf32> to vector<4x1xf32>
    %35 = tpu.concatenate %30, %32, %8, %34 in 1 : vector<4x1xf32>, vector<4x1xf32>, vector<4x1xf32>, vector<4x1xf32> -> vector<4x4xf32>
    %c0_14 = arith.constant 0 : index
    %c0_15 = arith.constant 0 : index
    %c0_16 = arith.constant 0 : index
    %c0_17 = arith.constant 0 : index
    %36 = vector.load %arg5[%c0_14, %c0_15, %c0_16, %c0_17] : memref<1x1x4x128xf32, #tpu.memory_space<vmem>>, vector<1x1x4x4xf32>
    %37 = vector.shape_cast %36 : vector<1x1x4x4xf32> to vector<4x4xf32>
    %38 = arith.addf %37, %35 : vector<4x4xf32>
    %c0_18 = arith.constant 0 : index
    %c0_19 = arith.constant 0 : index
    %c0_20 = arith.constant 0 : index
    %c0_21 = arith.constant 0 : index
    %39 = vector.load %arg5[%c0_18, %c0_19, %c0_20, %c0_21] : memref<1x1x4x128xf32, #tpu.memory_space<vmem>>, vector<1x1x4x4xf32>
    %40 = vector.shape_cast %39 : vector<1x1x4x4xf32> to vector<4x4xf32>
    %41 = vector.shape_cast %38 : vector<4x4xf32> to vector<1x1x4x4xf32>
    tpu.vector_store %arg5[%c0_18, %c0_19, %c0_20, %c0_21], %41 {strides = array<i32>} : memref<1x1x4x128xf32, #tpu.memory_space<vmem>>, vector<1x1x4x4xf32>,
    return
  }
  func.func @transform_0(%arg0: i32, %arg1: i32, %arg2: i32) -> (i32, i32, i32) {
    %c1_i32 = arith.constant 1 : i32
    %0 = arith.muli %arg0, %c1_i32 : i32
    %1 = arith.addi %0, %arg1 : i32
    %c0_i32 = arith.constant 0 : i32
    %c0_i32_0 = arith.constant 0 : i32
    return %1, %c0_i32, %arg2 : i32, i32, i32
  }
  func.func @transform_1(%arg0: i32, %arg1: i32, %arg2: i32) -> (i32, i32, i32) {
    %c1_i32 = arith.constant 1 : i32
    %0 = arith.muli %arg0, %c1_i32 : i32
    %1 = arith.addi %0, %arg1 : i32
    %c0_i32 = arith.constant 0 : i32
    %c0_i32_0 = arith.constant 0 : i32
    return %1, %c0_i32, %arg2 : i32, i32, i32
  }
  func.func @transform_2(%arg0: i32, %arg1: i32, %arg2: i32) -> (i32, i32, i32, i32) {
    %c0_i32 = arith.constant 0 : i32
    %c0_i32_0 = arith.constant 0 : i32
    %c0_i32_1 = arith.constant 0 : i32
    %c0_i32_2 = arith.constant 0 : i32
    return %arg0, %c0_i32, %c0_i32_0, %c0_i32_1 : i32, i32, i32, i32
  }
}

</mosaic_0001>

<llo_original>
// kernel: tpu_custom_call.1
$region0: #{tpu_custom_call.1}
  #allocation0 [shape = 'u32[]', space=smem, size = 0x4, offset = 0x4, fixed_abs, tag = 'smem constant byte address 0x4 - core index']
  #allocation1 [shape = 'u32[144,128]{1,0:T(1,128)}', space=vmem, size = 0x12000, scoped, tag = 'internal scratch']
  %s0 = inlined_call_operand.hbm [shape: f32[2,4,256], index: 0, kind: input, shape index: {}]
  %s1 = inlined_call_operand.hbm [shape: f32[2,4,256], index: 1, kind: input, shape index: {}]
  %s2 = inlined_call_operand.hbm [shape: f32[2,1,4,128], index: 2, kind: output, shape index: {}]
  %s3 = sld [smem:[#allocation0]]
  $region53: #{tpu_custom_call.1} parent=0
    _
  %s5 = ssub.s32 1, %s3
  %s6 = scalar_select 0, %s5, %s3
  $region1: #{tpu_custom_call.1} parent=0
    #allocation2 [shape = 'u8[8192]{0}', space=vmem, size = 0x2000, scoped, tag = 'input window, operand 0']
    #allocation3 [shape = 's32[2]{0}', space=sflag, size = 0x8, scoped, tag = 'scoped memory for tpu_custom_call.1']
    #allocation4 [shape = 's32[2]{0}', space=sflag, size = 0x8, scoped, tag = 'scoped memory for tpu_custom_call.1']
    #allocation5 [shape = 'u8[8192]{0}', space=vmem, size = 0x2000, scoped, tag = 'input window, operand 1']
    #allocation6 [shape = 's32[2]{0}', space=sflag, size = 0x8, scoped, tag = 'scoped memory for tpu_custom_call.1']
    #allocation7 [shape = 'u8[4096]{0}', space=vmem, size = 0x1000, scoped, tag = 'output window, operand 0']
    %7 = vsyncpa [#allocation3], 0
    %s8 = scalar_lea.sflag [#allocation3], 1
    %9 = vsyncpa %s8, 0
    %10 = vsyncpa [#allocation6], 0
    %s11 = scalar_lea.sflag [#allocation6], 1
    %12 = vsyncpa %s11, 0
    %13 = vsyncpa [#allocation4], 0
    %s14 = scalar_lea.sflag [#allocation4], 1
    %15 = vsyncpa %s14, 0
    loop: start=0, step=1, limit=4
    $region2: #{tpu_custom_call.1} parent=1 // loop_pre_header
      _
    $region3: #{tpu_custom_call.1} parent=1 // loop_header
      %s17 = sphi 0, %s21
      %p18 = scmp.ge.s32.totalorder %s17, 4
      %s24 = sphi 0, %s43
      %s25 = sphi 0, %s39
      %s26 = sphi 0, %s35
      %s27 = sphi 0, %s24
      %s28 = sphi 0, %s25
      %s29 = sphi 0, %s26
      %s30 = sphi 0, %s27
      %s31 = sphi 0, %s28
      %s32 = sphi 0, %s29
      %s50 = sphi 0, %s52
      %s53 = sphi 0, %s50
      %s54 = sphi 0, %s53
      %s70 = sphi 0, %s54
      %s80 = sphi 0, %s82
      %s83 = sphi 0, %s80
      %s84 = sphi 0, %s83
      %s100 = sphi 0, %s84
      %s106 = sphi 0, %s108
      %s109 = sphi 0, %s106
      %s110 = sphi 0, %s109
      %s126 = sphi 0, %s110
    $region4: #{tpu_custom_call.1} parent=1 // loop_header_branch
      %20 = sbr.rel (%p18) target = $region8
    $region5: #{tpu_custom_call.1} parent=1 // loop_body
      %s22 = ssub.s32 %s17, 1
      %s23 = ssub.s32 %s17, 2
      %s33 = sadd.s32 1, %s26
      %p34 = scmp.ge.s32.totalorder %s33, 1
      %s35 = scalar_select %p34, 0, %s33
      %s36 = sadd.s32 1, %s25
      %s37 = scalar_select %p34, %s36, %s25
      %p38 = scmp.ge.s32.totalorder %s37, 1
      %s39 = scalar_select %p38, 0, %s37
      %s40 = sadd.s32 1, %s24
      %s41 = scalar_select %p38, %s40, %s24
      %p42 = scmp.ge.s32.totalorder %s41, 2
      %s43 = scalar_select %p42, 0, %s41
      %s44 = sadd.s32 %s24, %s25
      %s45 = sadd.s32 %s43, %s39
      %s46 = ssub.s32 %s44, %s45
      %s47 = ssub.s32 %s26, %s35
      %s48 = sor.u32 %s46, %s47
      %p49 = scmp.eq.s32.totalorder %s48, 0
      %s51 = sadd.s32 %s50, 1
      %s52 = scalar_select %p49, %s50, %s51
      %p55 = pneg %p49
      %p56 = scmp.eq.s32.totalorder %s17, 1
      %p57 = por %p55, %p56
      %p58 = scmp.ne.s32.totalorder %s50, %s53
      %p59 = scmp.eq.s32.totalorder %s17, 0
      %p60 = por %p58, %p59
      %p61 = scmp.ne.s32.totalorder %s50, %s53
      %p62 = scmp.eq.s32.totalorder %s22, 1
      %p63 = por %p61, %p62
      %p64 = scmp.ne.s32.totalorder %s53, %s54
      %p65 = scmp.eq.s32.totalorder %s22, 0
      %p66 = por %p64, %p65
      %p67 = scmp.ne.s32.totalorder %s53, %s54
      %p68 = scmp.eq.s32.totalorder %s23, 1
      %p69 = por %p67, %p68
      %p71 = scmp.ne.s32.totalorder %s54, %s70
      %p72 = scmp.eq.s32.totalorder %s23, 0
      %p73 = por %p71, %p72
      %s74 = sadd.s32 %s24, %s25
      %s75 = sadd.s32 %s43, %s39
      %s76 = ssub.s32 %s74, %s75
      %s77 = ssub.s32 %s26, %s35
      %s78 = sor.u32 %s76, %s77
      %p79 = scmp.eq.s32.totalorder %s78, 0
      %s81 = sadd.s32 %s80, 1
      %s82 = scalar_select %p79, %s80, %s81
      %p85 = pneg %p79
      %p86 = scmp.eq.s32.totalorder %s17, 1
      %p87 = por %p85, %p86
      %p88 = scmp.ne.s32.totalorder %s80, %s83
      %p89 = scmp.eq.s32.totalorder %s17, 0
      %p90 = por %p88, %p89
      %p91 = scmp.ne.s32.totalorder %s80, %s83
      %p92 = scmp.eq.s32.totalorder %s22, 1
      %p93 = por %p91, %p92
      %p94 = scmp.ne.s32.totalorder %s83, %s84
      %p95 = scmp.eq.s32.totalorder %s22, 0
      %p96 = por %p94, %p95
      %p97 = scmp.ne.s32.totalorder %s83, %s84
      %p98 = scmp.eq.s32.totalorder %s23, 1
      %p99 = por %p97, %p98
      %p101 = scmp.ne.s32.totalorder %s84, %s100
      %p102 = scmp.eq.s32.totalorder %s23, 0
      %p103 = por %p101, %p102
      %s104 = ssub.s32 %s24, %s43
      %p105 = scmp.eq.s32.totalorder %s104, 0
      %s107 = sadd.s32 %s106, 1
      %s108 = scalar_select %p105, %s106, %s107
      %p111 = pneg %p105
      %p112 = scmp.eq.s32.totalorder %s17, 1
      %p113 = por %p111, %p112
      %p114 = scmp.ne.s32.totalorder %s106, %s109
      %p115 = scmp.eq.s32.totalorder %s17, 0
      %p116 = por %p114, %p115
      %p117 = scmp.ne.s32.totalorder %s106, %s109
      %p118 = scmp.eq.s32.totalorder %s22, 1
      %p119 = por %p117, %p118
      %p120 = scmp.ne.s32.totalorder %s109, %s110
      %p121 = scmp.eq.s32.totalorder %s22, 0
      %p122 = por %p120, %p121
      %p123 = scmp.ne.s32.totalorder %s109, %s110
      %p124 = scmp.eq.s32.totalorder %s23, 1
      %p125 = por %p123, %p124
      %p127 = scmp.ne.s32.totalorder %s110, %s126
      %p128 = scmp.eq.s32.totalorder %s23, 0
      %p129 = por %p127, %p128
      %p130 = scmp.le.s32.totalorder 1, %s17
      %p131 = scmp.lt.s32.totalorder %s17, 3
      %p132 = pnand %p130, %p131
      %p133 = pneg %p132
      // Predicated region
      $region9: #{tpu_custom_call.1} parent=5 // pred_check
        _
      $region10: #{tpu_custom_call.1} parent=5 // pred_check_branch
        %135 = sbr.rel (%p132) target = $region12
      $region11: #{tpu_custom_call.1} parent=5 // pred_region
        %s136 = ssub.s32 %s17, 1
      $region12: #{tpu_custom_call.1} parent=5 // pred_fallthru
        _
      %p137 = scmp.lt.s32.totalorder %s17, 2
      // Predicated region
      $region13: #{tpu_custom_call.1} parent=5 // pred_check
        %p138 = pneg %p137
      $region14: #{tpu_custom_call.1} parent=5 // pred_check_branch
        %140 = sbr.rel (%p138) target = $region16
      $region15: #{tpu_custom_call.1} parent=5 // pred_region
        // Predicated region
        $region17: #{tpu_custom_call.1} parent=15 // pred_check
          %p141 = pneg %p60
        $region18: #{tpu_custom_call.1} parent=15 // pred_check_branch
          %143 = sbr.rel (%p141) target = $region20
        $region19: #{tpu_custom_call.1} parent=15 // pred_region
          %s144 = sand.u32 %s50, 1
          %s145 = scalar_lea.sflag [#allocation3], %s144
          %s146 = sand.u32 %s50, 1
          %s147 = smul.addr %s146, 8
          %s148 = scalar_lea.vmem [#allocation2], %s147
          %s149 = sadd.s32 %s24, %s25
          %s150 = smul.u32 2, %s26
          %s152 = ssub.s32 128, 128
          %153 = vsyncadd %s145, %s152
          %s154 = smul.addr %s149, 2
          %s155 = sadd.s32 %s150, %s154
          %s156 = smul.addr %s155, 64
          %s157 = scalar_lea.hbm %s0, %s156
          %s159 = sshll.u32 %s148, 4
          %s160 = int_to_ptr.vmem [resolvable:$true] %s159
          %162 = dma.hbm_to_vmem [thread:$0]  %s157, 128, %s160, %s145
        $region20: #{tpu_custom_call.1} parent=15 // pred_fallthru
          _
        // Predicated region
        $region21: #{tpu_custom_call.1} parent=15 // pred_check
          %p163 = pneg %p90
        $region22: #{tpu_custom_call.1} parent=15 // pred_check_branch
          %165 = sbr.rel (%p163) target = $region24
        $region23: #{tpu_custom_call.1} parent=15 // pred_region
          %s166 = sand.u32 %s80, 1
          %s167 = scalar_lea.sflag [#allocation6], %s166
          %s168 = sand.u32 %s80, 1
          %s169 = smul.addr %s168, 8
          %s170 = scalar_lea.vmem [#allocation5], %s169
          %s171 = sadd.s32 %s24, %s25
          %s172 = smul.u32 2, %s26
          %s174 = ssub.s32 128, 128
          %175 = vsyncadd %s167, %s174
          %s176 = smul.addr %s171, 2
          %s177 = sadd.s32 %s172, %s176
          %s178 = smul.addr %s177, 64
          %s179 = scalar_lea.hbm %s1, %s178
          %s181 = sshll.u32 %s170, 4
          %s182 = int_to_ptr.vmem [resolvable:$true] %s181
          %184 = dma.hbm_to_vmem [thread:$0]  %s179, 128, %s182, %s167
        $region24: #{tpu_custom_call.1} parent=15 // pred_fallthru
          _
      $region16: #{tpu_custom_call.1} parent=5 // pred_fallthru
        _
      %p185 = scmp.le.s32.totalorder 1, %s17
      %p186 = scmp.lt.s32.totalorder %s17, 3
      %p187 = pnand %p185, %p186
      %p188 = pneg %p187
      // Predicated region
      $region25: #{tpu_custom_call.1} parent=5 // pred_check
        _
      $region26: #{tpu_custom_call.1} parent=5 // pred_check_branch
        %190 = sbr.rel (%p187) target = $region28
      $region27: #{tpu_custom_call.1} parent=5 // pred_region
        %s191 = ssub.s32 %s17, 1
        %s192 = sand.u32 %s53, 1
        %s193 = scalar_lea.sflag [#allocation3], %s192
        %s194 = sand.u32 %s53, 1
        %s195 = smul.addr %s194, 8
        %s196 = scalar_lea.vmem [#allocation2], %s195
        // Predicated region
        $region29: #{tpu_custom_call.1} parent=27 // pred_check
          %p197 = pneg %p66
        $region30: #{tpu_custom_call.1} parent=27 // pred_check_branch
          %199 = sbr.rel (%p197) target = $region32
        $region31: #{tpu_custom_call.1} parent=27 // pred_region
          %200 = dma.done %s193, 128
        $region32: #{tpu_custom_call.1} parent=27 // pred_fallthru
          _
        %s201 = sand.u32 %s83, 1
        %s202 = scalar_lea.sflag [#allocation6], %s201
        %s203 = sand.u32 %s83, 1
        %s204 = smul.addr %s203, 8
        %s205 = scalar_lea.vmem [#allocation5], %s204
        // Predicated region
        $region33: #{tpu_custom_call.1} parent=27 // pred_check
          %p206 = pneg %p96
        $region34: #{tpu_custom_call.1} parent=27 // pred_check_branch
          %208 = sbr.rel (%p206) target = $region36
        $region35: #{tpu_custom_call.1} parent=27 // pred_region
          %209 = dma.done %s202, 128
        $region36: #{tpu_custom_call.1} parent=27 // pred_fallthru
          _
        %s210 = sand.u32 %s53, 1
        %s211 = scalar_lea.sflag [#allocation3], %s210
        %s212 = sand.u32 %s53, 1
        %s213 = smul.addr %s212, 8
        %s214 = scalar_lea.vmem [#allocation2], %s213
        %p215 = pneg %p66
        %p216 = pneg %p63
        %s217 = sand.u32 %s83, 1
        %s218 = scalar_lea.sflag [#allocation6], %s217
        %s219 = sand.u32 %s83, 1
        %s220 = smul.addr %s219, 8
        %s221 = scalar_lea.vmem [#allocation5], %s220
        %p222 = pneg %p96
        %p223 = pneg %p93
        %p224 = pneg %p122
        %p225 = pneg %p119
        %s226 = sand.u32 %s109, 1
        %s227 = scalar_lea.sflag [#allocation4], %s226
        %s228 = sand.u32 %s109, 1
        %s229 = smul.addr %s228, 4
        %s230 = scalar_lea.vmem [#allocation7], %s229
        %s231 = sadd.s32 %s27, %s28
        %s232 = smul.u32 2, %s29
        %s233 = sadd.s32 %s27, %s28
        %s234 = smul.u32 2, %s29
        %p235 = scmp.eq.s32.totalorder %s28, 0
        %p236 = scmp.eq.s32.totalorder %s29, 0
        %p237 = pnand %p235, %p236
        %p238 = pneg %p237
        // Predicated region
        $region37: #{tpu_custom_call.1} parent=27 // pred_check
          _
        $region38: #{tpu_custom_call.1} parent=27 // pred_check_branch
          %240 = sbr.rel (%p237) target = $region40
        $region39: #{tpu_custom_call.1} parent=27 // pred_region
          %241 = vst [vmem:[%s230] sm:$0xf] 0.0
        $region40: #{tpu_custom_call.1} parent=27 // pred_fallthru
          _
        %v242 = vld [vmem:[%s205] sm:$0xff]
        %v244 = vcombine.high %v242, %v242
        %vm246 = vcmask 1043456
        %v247 = vsel %vm246, %v242, 0.0
        %v248 = vsel %vm246, %v244, 0.0
        %v249 = vadd.f32 %v247, %v248
        %250 = vadd.xlane.f32.xlu0 %v249
        %v251 = vpop.xlane.xlu0 %250
        %v252 = vld [vmem:[%s196] sm:$0xff]
        %v253 = vand.u32 2147483647, %v252
        %v254 = vsub.f32 0.0, %v253
        %v255 = vmul.f32 %v254, 1.442695
        %v256 = vpow.pop %v255
        %v257 = vadd.f32 %v256, 1.0
        %v258 = vrcp.pop %v257
        %vm259 = vcmp.ge.f32.partialorder %v252, 0.0
        %v260 = vmul.f32 %v256, %v258
        %v261 = vsel %vm259, %v258, %v260
        %v262 = vmax.f32 %v252, 0.0
        %v263 = vmul.f32 %v252, %v242
        %v264 = vsub.f32 %v262, %v263
        %v265 = vadd.f32 %v256, 1.0
        %v266 = vlog2.pop %v265
        %v267 = vmul.f32 %v266, 0.6931472
        %v268 = vmul.f32 -0.5, %v256
        %v269 = vadd.f32 %v268, 1.0
        %v270 = vmul.f32 %v269, %v256
        %v271 = vand.u32 2147483647, %v256
        %vm272 = vcmp.lt.f32.partialorder %v271, 0.0004427343
        %v273 = vsel %vm272, %v270, %v267
        %v274 = vadd.f32 %v264, %v273
        %v275 = vmul.f32 %v261, %v242
        %v277 = vcombine.high %v275, %v275
        %v279 = vsel %vm246, %v275, 0.0
        %v280 = vsel %vm246, %v277, 0.0
        %v281 = vadd.f32 %v279, %v280
        %282 = vadd.xlane.f32.xlu0 %v281
        %v283 = vpop.xlane.xlu0 %282
        %v285 = vcombine.high %v261, %v261
        %v287 = vsel %vm246, %v261, 0.0
        %v288 = vsel %vm246, %v285, 0.0
        %v289 = vadd.f32 %v287, %v288
        %290 = vadd.xlane.f32.xlu0 %v289
        %v291 = vpop.xlane.xlu0 %290
        %v293 = vcombine.high %v274, %v274
        %v295 = vsel %vm246, %v274, 0.0
        %v296 = vsel %vm246, %v293, 0.0
        %v297 = vadd.f32 %v295, %v296
        %298 = vadd.xlane.f32.xlu0 %v297
        %v299 = vpop.xlane.xlu0 %298
        %vm300 = vcmask 7168
        %v301 = vsel %vm300, %v283, %v291
        %vm302 = vcmask 15360
        %v303 = vsel %vm302, %v301, %v251
        %vm304 = vcmask 23552
        %v305 = vsel %vm304, %v303, %v299
        %v306 = vld [vmem:[%s230] sm:$0xf]
        %v307 = vadd.f32 %v306, %v305
        %vm308 = vcmask 27648
        %309 = vst.msk [vmem:[%s230] sm:$0xf] %vm308, %v307
        %s310 = sand.u32 %s109, 1
        %s311 = scalar_lea.sflag [#allocation4], %s310
        %s312 = sand.u32 %s109, 1
        %s313 = smul.addr %s312, 4
        %s314 = scalar_lea.vmem [#allocation7], %s313
        // Predicated region
        $region41: #{tpu_custom_call.1} parent=27 // pred_check
          %p315 = pneg %p119
        $region42: #{tpu_custom_call.1} parent=27 // pred_check_branch
          %317 = sbr.rel (%p315) target = $region44
        $region43: #{tpu_custom_call.1} parent=27 // pred_region
          %s319 = ssub.s32 64, 64
          %320 = vsyncadd %s311, %s319
          %s321 = smul.addr %s27, 64
          %s322 = scalar_lea.hbm %s2, %s321
          %s324 = sshll.u32 %s314, 4
          %s325 = int_to_ptr.vmem [resolvable:$true] %s324
          %327 = dma.vmem_to_hbm [thread:$0]  %s325, 64, %s322, %s311
        $region44: #{tpu_custom_call.1} parent=27 // pred_fallthru
          _
      $region28: #{tpu_custom_call.1} parent=5 // pred_fallthru
        _
      %p328 = scmp.le.s32.totalorder 2, %s17
      // Predicated region
      $region45: #{tpu_custom_call.1} parent=5 // pred_check
        %p329 = pneg %p328
      $region46: #{tpu_custom_call.1} parent=5 // pred_check_branch
        %331 = sbr.rel (%p329) target = $region48
      $region47: #{tpu_custom_call.1} parent=5 // pred_region
        %s332 = ssub.s32 %s17, 2
        // Predicated region
        $region49: #{tpu_custom_call.1} parent=47 // pred_check
          %p333 = pneg %p125
        $region50: #{tpu_custom_call.1} parent=47 // pred_check_branch
          %335 = sbr.rel (%p333) target = $region52
        $region51: #{tpu_custom_call.1} parent=47 // pred_region
          %s336 = sand.u32 %s110, 1
          %s337 = scalar_lea.sflag [#allocation4], %s336
          %s338 = sand.u32 %s110, 1
          %s339 = smul.addr %s338, 4
          %s340 = scalar_lea.vmem [#allocation7], %s339
          %341 = dma.done %s337, 64
        $region52: #{tpu_custom_call.1} parent=47 // pred_fallthru
          _
      $region48: #{tpu_custom_call.1} parent=5 // pred_fallthru
        _
    $region6: #{tpu_custom_call.1} parent=1 // loop_footer
      %s21 = sadd.s32 1, %s17
    $region7: #{tpu_custom_call.1} parent=1 // loop_footer_branch
      %16 = sbr.rel target = $region3
    $region8: #{tpu_custom_call.1} parent=1 // loop_exit
      _
    %342 = vsyncpa [#allocation3], 1
    %s343 = scalar_lea.sflag [#allocation3], 1
    %344 = vsyncpa %s343, 1
    %345 = vsyncpa [#allocation6], 1
    %s346 = scalar_lea.sflag [#allocation6], 1
    %347 = vsyncpa %s346, 1
    %348 = vsyncpa [#allocation4], 1
    %s349 = scalar_lea.sflag [#allocation4], 1
    %350 = vsyncpa %s349, 1

</llo_original>
